<compile_context>
chip_gen: v5e
topology: v5e:2x2
jax: 0.10.0
libtpu: 0.0.40
codegen_flags: <defaults>
</compile_context>

<pallas_src>
from typing import List, Optional, Tuple

import jax
import jax.numpy as jnp
from jax.experimental import pallas as pl
from jax.experimental.pallas import tpu as pltpu

DimensionNames = List[Optional[str]]


# ----------------------------------------------------------------------------
# Name-handling glue (mirrors pytorch_named_dims.utils exactly, pure Python)
# ----------------------------------------------------------------------------
def names_compatible(names1: DimensionNames, names2: DimensionNames) -> bool:
    if len(names1) != len(names2):
        return False
    for name1, name2 in zip(names1, names2):
        if name1 is not None and name2 is not None and (name1 != name2):
            return False
    return True


def split_names(names_operation: DimensionNames) -> Tuple[DimensionNames, DimensionNames]:
    asterisks = sum((name == '*' for name in names_operation))
    if asterisks == 0:
        return (names_operation[:], [])
    elif asterisks == 1:
        split = names_operation.index('*')
        return (names_operation[:split], names_operation[split + 1:])
    else:
        raise ValueError("More than one '*' in module dimension names.")


def split_and_compare(names_in: DimensionNames, x_names: DimensionNames,
                      layer_name: str = '') -> DimensionNames:
    error_msg = (f'Layer {layer_name} requires dimensions {names_in} '
                 f'but got {x_names} instead.')
    names_in_first, names_in_last = split_names(names_in)
    if len(names_in_first) + len(names_in_last) == len(names_in):
        if not names_compatible(names_in, x_names):
            raise ValueError(error_msg)
        return []
    else:
        names_first = x_names[:len(names_in_first)]
        names_middle = x_names[len(names_in_first):len(x_names) - len(names_in_last)]
        names_last = x_names[len(x_names) - len(names_in_last):]
        if (not names_compatible(names_in_first, names_first)
                or not names_compatible(names_in_last, names_last)):
            raise ValueError(error_msg)
        return names_middle


# ----------------------------------------------------------------------------
# Pallas kernels: fused batch GEMM (bias folded into the contraction)
# ----------------------------------------------------------------------------
def _conv_gemm_kernel_3d(p_ref, w_ref, o_ref):
    # p_ref : (K+1, THW)       im2col columns for one (sample, hw-tile)
    # w_ref : (C_out, K+1)     conv weight with bias column appended (resident)
    # o_ref : (1, C_out, THW)  output tile, written directly in (N,C_out,HW) layout
    o_ref[0] = jnp.dot(w_ref[...], p_ref[...],
                       preferred_element_type=jnp.float32).astype(o_ref.dtype)


def _conv_gemm_kernel_2d(p_ref, w_ref, o_ref):
    # p_ref : (K+1, TL)     im2col columns for one lane tile
    # w_ref : (C_out, K+1)  conv weight with bias column appended (resident)
    # o_ref : (C_out, TL)   output lane tile
    o_ref[...] = jnp.dot(w_ref[...], p_ref[...],
                         preferred_element_type=jnp.float32).astype(o_ref.dtype)


def _pick_hw_tiles(HW: int, lane: int, cap: int, want_min_tiles: int) -> int:
    """Tiles per sample s.t. THW = HW // n is a multiple of `lane`, divides HW
    exactly, and is <= cap; prefer at least `want_min_tiles` tiles."""
    max_tiles = HW // lane                       # smallest legal tile is `lane`
    n = min(max_tiles, max(pl.cdiv(HW, cap), want_min_tiles))
    while HW % n != 0 or (HW // n) % lane != 0:  # terminates: n == max_tiles works
        n += 1
    return n


def pallas_conv2d_same(x: jax.Array, w: jax.Array, b: jax.Array,
                       compute_dtype=None) -> jax.Array:
    """Conv2d, stride 1, 'same' padding (pad = K//2).  x: NCHW, w: OIHW, b: (C_out,).

    compute_dtype: optional MXU input dtype (e.g. jnp.bfloat16 on v6e/v7x;
    results drift past ~1e-4 vs f32).  Accumulation is always f32; output keeps
    x.dtype.
    """
    N, C_in, H, W = x.shape
    C_out, _, KH, KW = w.shape
    pad_h, pad_w = KH // 2, KW // 2
    K = KH * KW * C_in
    K1 = K + 1
    HW = H * W
    L = N * HW

    cd = compute_dtype if compute_dtype is not None else x.dtype

    # --- glue: im2col in one materializing pass, already in (K+1, N*HW) order ---
    # Cast BEFORE inflation and transpose the UN-inflated input to channel-major
    # so the slab concatenate lands directly in (K, N, H, W) order.
    xt = jnp.transpose(x.astype(cd), (1, 0, 2, 3))                        # (C_in, N, H, W)
    xp = jnp.pad(xt, ((0, 0), (0, 0), (pad_h, pad_h), (pad_w, pad_w)))    # (C_in, N, Hp, Wp)
    slabs = [xp[:, :, kh:kh + H, kw:kw + W] for kh in range(KH) for kw in range(KW)]
    slabs.append(jnp.ones((1, N, H, W), dtype=cd))                        # bias ones-row
    patches = jnp.concatenate(slabs, axis=0).reshape(K1, L)               # (K+1, N*HW), free reshape

    # Weight reordered to match patch row order ((kh*KW + kw)*C_in + c),
    # bias folded in as an extra column.
    w2 = jnp.transpose(w.astype(cd), (0, 2, 3, 1)).reshape(C_out, K)      # (C_out, K)
    w_aug = jnp.concatenate([w2, b.astype(cd).reshape(C_out, 1)], axis=1)  # (C_out, K+1)

    LANE = 128
    TL_CAP = 16384   # ~2.4 MB f32 patch tile; x2 buffers + output tiles ~= 6 MB VMEM

    itemsize = jnp.dtype(cd).itemsize
    cost = pl.CostEstimate(
        flops=2 * C_out * K1 * L,
        transcendentals=0,
        bytes_accessed=(K1 * L + C_out * K1) * itemsize
                       + C_out * L * jnp.dtype(x.dtype).itemsize,
    )
    cparams = pltpu.CompilerParams(
        dimension_semantics=("parallel", "parallel"),  # overwritten below for 1-D grid
        vmem_limit_bytes=32 * 1024 * 1024,             # plenty of headroom even on v7x (64 MiB phys)
    )

    if HW % LANE == 0:
        # ---- Path A: write the output directly as (N, C_out, HW) -------------
        # Lane-dense (multiple-of-128) stores, no epilogue transpose.  Grid has
        # N * n_hw_tiles independent "parallel" steps (>= 2 whenever possible)
        # so v7x can shard across both TensorCores.
        n_hw_tiles = _pick_hw_tiles(HW, LANE, TL_CAP, want_min_tiles=1 if N >= 2 else 2)
        THW = HW // n_hw_tiles
        out = pl.pallas_call(
            _conv_gemm_kernel_3d,
            out_shape=jax.ShapeDtypeStruct((N, C_out, HW), x.dtype),
            grid_spec=pltpu.PrefetchScalarGridSpec(
                num_scalar_prefetch=0,
                grid=(N, n_hw_tiles),
                in_specs=[
                    pl.BlockSpec((K1, THW), lambda n, t: (0, n * n_hw_tiles + t)),
                    pl.BlockSpec((C_out, K1), lambda n, t: (0, 0)),   # resident weight
                ],
                out_specs=pl.BlockSpec((1, C_out, THW), lambda n, t: (n, 0, t)),
            ),
            compiler_params=cparams,
            cost_estimate=cost,
        )(patches, w_aug)
        return out.reshape(N, C_out, H, W)          # free trailing-dim split
    else:
        # ---- Path B (general fallback): (C_out, L) output, ragged last tile ---
        # No padded copy of the patch matrix: the last lane tile may overrun L;
        # Pallas masks its writeback and garbage patch columns only ever feed
        # garbage (discarded) output columns.
        max_tiles = max(1, pl.cdiv(L, LANE))
        n_tiles = min(max_tiles, max(pl.cdiv(L, TL_CAP), 2 if L >= 2 * LANE else 1))
        if n_tiles > 1 and n_tiles % 2:
            n_tiles += 1                             # even count: balance the 2 TCs on v7x
        TL = ((pl.cdiv(L, n_tiles) + LANE - 1) // LANE) * LANE
        n_tiles = pl.cdiv(L, TL)
        out = pl.pallas_call(
            _conv_gemm_kernel_2d,
            out_shape=jax.ShapeDtypeStruct((C_out, L), x.dtype),
            grid_spec=pltpu.PrefetchScalarGridSpec(
                num_scalar_prefetch=0,
                grid=(n_tiles,),
                in_specs=[
                    pl.BlockSpec((K1, TL), lambda j: (0, j)),
                    pl.BlockSpec((C_out, K1), lambda j: (0, 0)),      # resident weight
                ],
                out_specs=pl.BlockSpec((C_out, TL), lambda j: (0, j)),
            ),
            compiler_params=pltpu.CompilerParams(
                dimension_semantics=("parallel",),
                vmem_limit_bytes=32 * 1024 * 1024,
            ),
            cost_estimate=cost,
        )(patches, w_aug)
        out = out.reshape(C_out, N, H, W)
        return jnp.transpose(out, (1, 0, 2, 3))


# ----------------------------------------------------------------------------
# Wrapped "module" + NamedModuleWrapper equivalent
# ----------------------------------------------------------------------------
class PallasConv2d:
    """Stands in for nn.Conv2d(C_in, C_out, kernel_size=3, padding=1, bias=True)."""

    def __init__(self, weight: jax.Array, bias: jax.Array, compute_dtype=None):
        self.weight = weight           # (C_out, C_in, KH, KW)
        self.bias = bias               # (C_out,)
        self.compute_dtype = compute_dtype

    def _get_name(self) -> str:
        return "PallasConv2d"

    def forward(self, x, *args, **kwargs):
        return pallas_conv2d_same(x, self.weight, self.bias,
                                  compute_dtype=self.compute_dtype)


class NamedModuleWrapper:
    """JAX/Pallas port of pytorch_named_dims.utils.NamedModuleWrapper.

    JAX arrays do not carry dimension names, so the names travel alongside the
    array as a plain Python list (the equivalent of `x.names`).  `rename(None)`
    is a no-op (the array is already unnamed); `refine_names` becomes returning
    the computed output-name list next to the output array.
    """

    def __init__(self, module, names_in: DimensionNames,
                 names_out: Optional[DimensionNames] = None):
        self.module = module
        self.names_in = names_in
        self.names_out = names_out if names_out is not None else names_in

    def forward(self, x: jax.Array, x_names: DimensionNames, *args, **kwargs):
        names_middle = split_and_compare(self.names_in, list(x_names),
                                         layer_name=self.module._get_name())
        # x.rename(None): JAX arrays are already unnamed -> no-op.
        y = self.module.forward(x, *args, **kwargs)
        names_out_first, names_out_last = split_names(self.names_out)
        y_names = [*names_out_first, *names_middle, *names_out_last]
        if len(y_names) != y.ndim:   # mirrors refine_names rank check
            raise ValueError(
                f"Output rank {y.ndim} does not match output names {y_names}.")
        return y, y_names


# ----------------------------------------------------------------------------
if __name__ == "__main__":
    key = jax.random.PRNGKey(0)
    kx, kw, kb = jax.random.split(key, 3)

    N, C_in, H, W = 2, 4, 16, 16
    C_out, KH, KW = 8, 3, 3

    x = jax.random.normal(kx, (N, C_in, H, W), dtype=jnp.float32)

    # Deterministic Conv2d-style init (kaiming-uniform-ish bounds).
    fan_in = C_in * KH * KW
    bound = 1.0 / (fan_in ** 0.5)
    weight = jax.random.uniform(kw, (C_out, C_in, KH, KW), jnp.float32, -bound, bound)
    bias = jax.random.uniform(kb, (C_out,), jnp.float32, -bound, bound)

    conv = PallasConv2d(weight, bias)   # compute_dtype=jnp.bfloat16 on v6e/v7x if tolerated
    wrapped = NamedModuleWrapper(conv, names_in=['N', 'C', 'H', 'W'])

    y, y_names = wrapped.forward(x, ['N', 'C', 'H', 'W'])
    y = jax.block_until_ready(y)

    # Reference check against XLA conv.
    ref = jax.lax.conv_general_dilated(
        x, weight, window_strides=(1, 1), padding='SAME',
        dimension_numbers=('NCHW', 'OIHW', 'NCHW')) + bias[None, :, None, None]

    assert y.shape == (N, C_out, H, W), y.shape
    assert y_names == ['N', 'C', 'H', 'W'], y_names
    assert jnp.allclose(y, ref, atol=1e-4, rtol=1e-4), float(jnp.max(jnp.abs(y - ref)))

    print("KERNEL_OK")
</pallas_src>

<mosaic_0001>
module attributes {stable_mosaic.version = 11 : i64} {
  func.func @_conv_gemm_kernel_3d(%arg0: i32, %arg1: i32, %arg2: memref<37x256xf32, #tpu.memory_space<vmem>>, %arg3: memref<8x37xf32, #tpu.memory_space<vmem>>, %arg4: memref<1x8x256xf32, #tpu.memory_space<vmem>>) attributes {dimension_semantics = [#tpu.dimension_semantics<parallel>, #tpu.dimension_semantics<parallel>], iteration_bounds = array<i64: 2, 1>, scalar_prefetch = 0 : i64, scratch_operands = 0 : i64, tpu.core_type = #tpu.core_type<tc>, window_params = [{transform_indices = @transform_0, window_bounds = array<i64: 37, 256>}, {pipeline_mode = #tpu.pipeline_mode<synchronous>, transform_indices = @transform_1, window_bounds = array<i64: 8, 37>}, {transform_indices = @transform_2, window_bounds = array<i64: 1, 8, 256>}]} {
    %c0 = arith.constant 0 : index
    %c0_0 = arith.constant 0 : index
    %0 = vector.load %arg3[%c0, %c0_0] : memref<8x37xf32, #tpu.memory_space<vmem>>, vector<8x37xf32>
    %c0_1 = arith.constant 0 : index
    %c0_2 = arith.constant 0 : index
    %1 = vector.load %arg2[%c0_1, %c0_2] : memref<37x256xf32, #tpu.memory_space<vmem>>, vector<37x256xf32>
    %cst = arith.constant dense<0.000000e+00> : vector<8x256xf32>
    %2 = tpu.matmul %0, %1, %cst {dimension_numbers = #tpu.dot_dimension_numbers<[1], [0], [0], [1], [0, 0, 1, 1], [], []>} : vector<8x37xf32>, vector<37x256xf32>, vector<8x256xf32> -> vector<8x256xf32>
    %c0_3 = arith.constant 0 : index
    %c0_4 = arith.constant 0 : index
    %c0_5 = arith.constant 0 : index
    %3 = vector.load %arg4[%c0_3, %c0_4, %c0_5] : memref<1x8x256xf32, #tpu.memory_space<vmem>>, vector<1x8x256xf32>
    %4 = vector.shape_cast %3 : vector<1x8x256xf32> to vector<8x256xf32>
    %5 = vector.shape_cast %2 : vector<8x256xf32> to vector<1x8x256xf32>
    tpu.vector_store %arg4[%c0_3, %c0_4, %c0_5], %5 {strides = array<i32>} : memref<1x8x256xf32, #tpu.memory_space<vmem>>, vector<1x8x256xf32>,
    return
  }
  func.func @transform_0(%arg0: i32, %arg1: i32) -> (i32, i32) {
    %c1_i32 = arith.constant 1 : i32
    %0 = arith.muli %arg0, %c1_i32 : i32
    %1 = arith.addi %0, %arg1 : i32
    %c0_i32 = arith.constant 0 : i32
    %c0_i32_0 = arith.constant 0 : i32
    return %c0_i32, %1 : i32, i32
  }
  func.func @transform_1(%arg0: i32, %arg1: i32) -> (i32, i32) {
    %c0_i32 = arith.constant 0 : i32
    %c0_i32_0 = arith.constant 0 : i32
    %c0_i32_1 = arith.constant 0 : i32
    return %c0_i32, %c0_i32_0 : i32, i32
  }
  func.func @transform_2(%arg0: i32, %arg1: i32) -> (i32, i32, i32) {
    %c0_i32 = arith.constant 0 : i32
    %c0_i32_0 = arith.constant 0 : i32
    return %arg0, %c0_i32, %arg1 : i32, i32, i32
  }
}

</mosaic_0001>

<llo_original>
// kernel: tpu_custom_call.1
$region0: #{tpu_custom_call.1}
  #allocation0 [shape = 'u32[]', space=smem, size = 0x4, offset = 0x4, fixed_abs, tag = 'smem constant byte address 0x4 - core index']
  #allocation1 [shape = 'u32[72,128]{1,0:T(1,128)}', space=vmem, size = 0x9000, scoped, tag = 'internal scratch']
  %s0 = inlined_call_operand.hbm [shape: f32[37,512], index: 0, kind: input, shape index: {}]
  %s1 = inlined_call_operand.hbm [shape: f32[8,37], index: 1, kind: input, shape index: {}]
  %s2 = inlined_call_operand.hbm [shape: f32[2,8,256], index: 2, kind: output, shape index: {}]
  %s3 = sld [smem:[#allocation0]]
  $region49: #{tpu_custom_call.1} parent=0
    _
  %s5 = ssub.s32 1, %s3
  %s6 = scalar_select 0, %s5, %s3
  $region1: #{tpu_custom_call.1} parent=0
    #allocation2 [shape = 'u8[81920]{0}', space=vmem, size = 0x14000, scoped, tag = 'input window, operand 0']
    #allocation3 [shape = 's32[2]{0}', space=sflag, size = 0x8, scoped, tag = 'scoped memory for tpu_custom_call.1']
    #allocation4 [shape = 's32[2]{0}', space=sflag, size = 0x8, scoped, tag = 'scoped memory for tpu_custom_call.1']
    #allocation5 [shape = 'u8[4096]{0}', space=vmem, size = 0x1000, scoped, tag = 'input window, operand 1, single buffered']
    #allocation6 [shape = 's32[1]{0}', space=sflag, size = 0x4, scoped, tag = 'scoped memory for tpu_custom_call.1']
    #allocation7 [shape = 'u8[16384]{0}', space=vmem, size = 0x4000, scoped, tag = 'output window, operand 0']
    %7 = vsyncpa [#allocation3], 0
    %s8 = scalar_lea.sflag [#allocation3], 1
    %9 = vsyncpa %s8, 0
    %10 = vsyncpa [#allocation6], 0
    %11 = vsyncpa [#allocation4], 0
    %s12 = scalar_lea.sflag [#allocation4], 1
    %13 = vsyncpa %s12, 0
    loop: start=0, step=1, limit=4
    $region2: #{tpu_custom_call.1} parent=1 // loop_pre_header
      _
    $region3: #{tpu_custom_call.1} parent=1 // loop_header
      %s15 = sphi 0, %s19
      %p16 = scmp.ge.s32.totalorder %s15, 4
      %s22 = sphi 0, %s34
      %s23 = sphi 0, %s30
      %s24 = sphi 0, %s22
      %s25 = sphi 0, %s23
      %s26 = sphi 0, %s24
      %s27 = sphi 0, %s25
      %s39 = sphi 0, %s41
      %s42 = sphi 0, %s39
      %s43 = sphi 0, %s42
      %s59 = sphi 0, %s43
      %s63 = sphi 0, %s63
      %s65 = sphi 0, %s63
      %s66 = sphi 0, %s65
      %s80 = sphi 0, %s66
      %s88 = sphi 0, %s90
      %s91 = sphi 0, %s88
      %s92 = sphi 0, %s91
      %s108 = sphi 0, %s92
    $region4: #{tpu_custom_call.1} parent=1 // loop_header_branch
      %18 = sbr.rel (%p16) target = $region8
    $region5: #{tpu_custom_call.1} parent=1 // loop_body
      %s20 = ssub.s32 %s15, 1
      %s21 = ssub.s32 %s15, 2
      %s28 = sadd.s32 1, %s23
      %p29 = scmp.ge.s32.totalorder %s28, 1
      %s30 = scalar_select %p29, 0, %s28
      %s31 = sadd.s32 1, %s22
      %s32 = scalar_select %p29, %s31, %s22
      %p33 = scmp.ge.s32.totalorder %s32, 2
      %s34 = scalar_select %p33, 0, %s32
      %s35 = sadd.s32 %s22, %s23
      %s36 = sadd.s32 %s34, %s30
      %s37 = ssub.s32 %s35, %s36
      %p38 = scmp.eq.s32.totalorder %s37, 0
      %s40 = sadd.s32 %s39, 1
      %s41 = scalar_select %p38, %s39, %s40
      %p44 = pneg %p38
      %p45 = scmp.eq.s32.totalorder %s15, 1
      %p46 = por %p44, %p45
      %p47 = scmp.ne.s32.totalorder %s39, %s42
      %p48 = scmp.eq.s32.totalorder %s15, 0
      %p49 = por %p47, %p48
      %p50 = scmp.ne.s32.totalorder %s39, %s42
      %p51 = scmp.eq.s32.totalorder %s20, 1
      %p52 = por %p50, %p51
      %p53 = scmp.ne.s32.totalorder %s42, %s43
      %p54 = scmp.eq.s32.totalorder %s20, 0
      %p55 = por %p53, %p54
      %p56 = scmp.ne.s32.totalorder %s42, %s43
      %p57 = scmp.eq.s32.totalorder %s21, 1
      %p58 = por %p56, %p57
      %p60 = scmp.ne.s32.totalorder %s43, %s59
      %p61 = scmp.eq.s32.totalorder %s21, 0
      %p62 = por %p60, %p61
      %s64 = sadd.s32 %s63, 1
      %p67 = scmp.eq.s32.totalorder %s15, 1
      %p68 = scmp.ne.s32.totalorder %s63, %s65
      %p69 = scmp.eq.s32.totalorder %s15, 0
      %p70 = por %p68, %p69
      %p71 = scmp.ne.s32.totalorder %s63, %s65
      %p72 = scmp.eq.s32.totalorder %s20, 1
      %p73 = por %p71, %p72
      %p74 = scmp.ne.s32.totalorder %s65, %s66
      %p75 = scmp.eq.s32.totalorder %s20, 0
      %p76 = por %p74, %p75
      %p77 = scmp.ne.s32.totalorder %s65, %s66
      %p78 = scmp.eq.s32.totalorder %s21, 1
      %p79 = por %p77, %p78
      %p81 = scmp.ne.s32.totalorder %s66, %s80
      %p82 = scmp.eq.s32.totalorder %s21, 0
      %p83 = por %p81, %p82
      %s84 = ssub.s32 %s22, %s34
      %s85 = ssub.s32 %s23, %s30
      %s86 = sor.u32 %s84, %s85
      %p87 = scmp.eq.s32.totalorder %s86, 0
      %s89 = sadd.s32 %s88, 1
      %s90 = scalar_select %p87, %s88, %s89
      %p93 = pneg %p87
      %p94 = scmp.eq.s32.totalorder %s15, 1
      %p95 = por %p93, %p94
      %p96 = scmp.ne.s32.totalorder %s88, %s91
      %p97 = scmp.eq.s32.totalorder %s15, 0
      %p98 = por %p96, %p97
      %p99 = scmp.ne.s32.totalorder %s88, %s91
      %p100 = scmp.eq.s32.totalorder %s20, 1
      %p101 = por %p99, %p100
      %p102 = scmp.ne.s32.totalorder %s91, %s92
      %p103 = scmp.eq.s32.totalorder %s20, 0
      %p104 = por %p102, %p103
      %p105 = scmp.ne.s32.totalorder %s91, %s92
      %p106 = scmp.eq.s32.totalorder %s21, 1
      %p107 = por %p105, %p106
      %p109 = scmp.ne.s32.totalorder %s92, %s108
      %p110 = scmp.eq.s32.totalorder %s21, 0
      %p111 = por %p109, %p110
      %p112 = scmp.le.s32.totalorder 1, %s15
      %p113 = scmp.lt.s32.totalorder %s15, 3
      %p114 = pnand %p112, %p113
      %p115 = pneg %p114
      // Predicated region
      $region9: #{tpu_custom_call.1} parent=5 // pred_check
        _
      $region10: #{tpu_custom_call.1} parent=5 // pred_check_branch
        %117 = sbr.rel (%p114) target = $region12
      $region11: #{tpu_custom_call.1} parent=5 // pred_region
        %s118 = ssub.s32 %s15, 1
        // Predicated region
        $region13: #{tpu_custom_call.1} parent=11 // pred_check
          %p119 = pneg %p76
        $region14: #{tpu_custom_call.1} parent=11 // pred_check_branch
          %121 = sbr.rel (%p119) target = $region16
        $region15: #{tpu_custom_call.1} parent=11 // pred_region
          %123 = vsyncadd [#allocation6], 0
          %s125 = sshll.u32 %s1, 4
          %s126 = int_to_ptr.hbm [resolvable:$true] %s125
          %s127 = sshll.u32 [#allocation5], 4
          %s128 = int_to_ptr.vmem [resolvable:$true] %s127
          %130 = dma.hbm_to_vmem [thread:$0]  %s126, 128, %s128, [#allocation6]
        $region16: #{tpu_custom_call.1} parent=11 // pred_fallthru
          _
      $region12: #{tpu_custom_call.1} parent=5 // pred_fallthru
        _
      %p131 = scmp.lt.s32.totalorder %s15, 2
      // Predicated region
      $region17: #{tpu_custom_call.1} parent=5 // pred_check
        %p132 = pneg %p131
      $region18: #{tpu_custom_call.1} parent=5 // pred_check_branch
        %134 = sbr.rel (%p132) target = $region20
      $region19: #{tpu_custom_call.1} parent=5 // pred_region
        // Predicated region
        $region21: #{tpu_custom_call.1} parent=19 // pred_check
          %p135 = pneg %p49
        $region22: #{tpu_custom_call.1} parent=19 // pred_check_branch
          %137 = sbr.rel (%p135) target = $region24
        $region23: #{tpu_custom_call.1} parent=19 // pred_region
          %s138 = sand.u32 %s39, 1
          %s139 = scalar_lea.sflag [#allocation3], %s138
          %s140 = sand.u32 %s39, 1
          %s141 = smul.addr %s140, 80
          %s142 = scalar_lea.vmem [#allocation2], %s141
          %s143 = sadd.s32 %s22, %s23
          %s144 = smul.u32 2, %s143
          %146 = vsyncadd %s139, 0
          %s147 = smul.addr %s144, 8
          %s148 = scalar_lea.hbm %s0, %s147
          %s149 = sshll.u32 %s148, 4
          %s150 = int_to_ptr.hbm [resolvable:$true] %s149
          %s151 = sshll.u32 %s142, 4
          %s152 = int_to_ptr.vmem [resolvable:$true] %s151
          %157 = dma.hbm_to_vmem [thread:$0]  %s150, 1280, %s152, %s139, 512, 256, 16
        $region24: #{tpu_custom_call.1} parent=19 // pred_fallthru
          _
      $region20: #{tpu_custom_call.1} parent=5 // pred_fallthru
        _
      %p158 = scmp.le.s32.totalorder 1, %s15
      %p159 = scmp.lt.s32.totalorder %s15, 3
      %p160 = pnand %p158, %p159
      %p161 = pneg %p160
      // Predicated region
      $region25: #{tpu_custom_call.1} parent=5 // pred_check
        _
      $region26: #{tpu_custom_call.1} parent=5 // pred_check_branch
        %163 = sbr.rel (%p160) target = $region28
      $region27: #{tpu_custom_call.1} parent=5 // pred_region
        %s164 = ssub.s32 %s15, 1
        %s165 = sand.u32 %s42, 1
        %s166 = scalar_lea.sflag [#allocation3], %s165
        %s167 = sand.u32 %s42, 1
        %s168 = smul.addr %s167, 80
        %s169 = scalar_lea.vmem [#allocation2], %s168
        // Predicated region
        $region29: #{tpu_custom_call.1} parent=27 // pred_check
          %p170 = pneg %p55
        $region30: #{tpu_custom_call.1} parent=27 // pred_check_branch
          %172 = sbr.rel (%p170) target = $region32
        $region31: #{tpu_custom_call.1} parent=27 // pred_region
          %174 = dma.done %s166, 1280
        $region32: #{tpu_custom_call.1} parent=27 // pred_fallthru
          _
        // Predicated region
        $region33: #{tpu_custom_call.1} parent=27 // pred_check
          %p175 = pneg %p76
        $region34: #{tpu_custom_call.1} parent=27 // pred_check_branch
          %177 = sbr.rel (%p175) target = $region36
        $region35: #{tpu_custom_call.1} parent=27 // pred_region
          %179 = dma.done [#allocation6], 128
        $region36: #{tpu_custom_call.1} parent=27 // pred_fallthru
          _
        %s180 = sand.u32 %s42, 1
        %s181 = scalar_lea.sflag [#allocation3], %s180
        %s182 = sand.u32 %s42, 1
        %s183 = smul.addr %s182, 80
        %s184 = scalar_lea.vmem [#allocation2], %s183
        %p185 = pneg %p55
        %p186 = pneg %p52
        %p187 = pneg %p76
        %p188 = pneg %p73
        %p189 = pneg %p104
        %p190 = pneg %p101
        %s191 = sand.u32 %s91, 1
        %s192 = scalar_lea.sflag [#allocation4], %s191
        %s193 = sand.u32 %s91, 1
        %s194 = smul.addr %s193, 16
        %s195 = scalar_lea.vmem [#allocation7], %s194
        %s196 = sadd.s32 %s24, %s25
        %s197 = smul.u32 2, %s196
        %s198 = smul.u32 2, %s25
        %v199 = vld [vmem:[#allocation5] sm:$0xff]
        %v200 = vld [vmem:[%s169] sm:$0xff]
        %v201 = vld [vmem:[%s169 + $0x8] sm:$0xff]
        %v202 = vld [vmem:[%s169 + $0x10] sm:$0xff]
        %v203 = vld [vmem:[%s169 + $0x18] sm:$0xff]
        %v204 = vld [vmem:[%s169 + $0x20] sm:$0xff]
        %v205 = vld [vmem:[%s169 + $0x28] sm:$0xff]
        %v206 = vld [vmem:[%s169 + $0x30] sm:$0xff]
        %v207 = vld [vmem:[%s169 + $0x38] sm:$0xff]
        %v208 = vld [vmem:[%s169 + $0x40] sm:$0x1f]
        %v209 = vld [vmem:[%s169 + $0x48] sm:$0x1f]
        %vm210 = vcmask 302080
        %v212 = vsel %vm210, %v199, 0
        %vm214 = vcmask 1044480
        %v216 = vsel %vm214, %v208, 0
        %v219 = vsel %vm214, %v209, 0
        %221 = vmatpush.msra.mxu0 0.0
        %222 = vmatpush.msra.mxu0 0.0
        %223 = vmatpush.msra.mxu0 0.0
        %224 = vmatpush.msra.mxu0 0.0
        %225 = vmatpush.msra.mxu0 0.0
        %226 = vmatpush.msra.mxu0 0.0
        %227 = vmatpush.msra.mxu0 0.0
        %228 = vmatpush.msra.mxu0 0.0
        %229 = vmatpush.msra.mxu0 0.0
        %230 = vmatpush.msra.mxu0 0.0
        %231 = vmatpush.msra.mxu0 0.0
        %232 = vmatpush.msra.mxu0 %v216
        %233 = vmatpush.msra.mxu0 %v206
        %234 = vmatpush.msra.mxu0 %v204
        %235 = vmatpush.msra.mxu0 %v202
        %236 = vmatpush.msra.mxu0 %v200
        %237 = vmatmul.f32.gmra.mxu0 %v212
        %v238 = vpop.f32.mrf.mxu0
        %v239 = vadd.f32 0.0, %v238
        %240 = vdwg.mxu0
        %241 = vmatpush.msra.mxu0 0.0
        %242 = vmatpush.msra.mxu0 0.0
        %243 = vmatpush.msra.mxu0 0.0
        %244 = vmatpush.msra.mxu0 0.0
        %245 = vmatpush.msra.mxu0 0.0
        %246 = vmatpush.msra.mxu0 0.0
        %247 = vmatpush.msra.mxu0 0.0
        %248 = vmatpush.msra.mxu0 0.0
        %249 = vmatpush.msra.mxu0 0.0
        %250 = vmatpush.msra.mxu0 0.0
        %251 = vmatpush.msra.mxu0 0.0
        %252 = vmatpush.msra.mxu0 %v219
        %253 = vmatpush.msra.mxu0 %v207
        %254 = vmatpush.msra.mxu0 %v205
        %255 = vmatpush.msra.mxu0 %v203
        %256 = vmatpush.msra.mxu0 %v201
        %257 = vmatmul.f32.gmra.mxu0 %v212
        %v258 = vpop.f32.mrf.mxu0
        %v259 = vadd.f32 0.0, %v258
        %260 = vdwg.mxu0
        %261 = vst [vmem:[%s195] sm:$0xff] %v239
        %262 = vst [vmem:[%s195 + $0x8] sm:$0xff] %v259
        %s263 = sand.u32 %s91, 1
        %s264 = scalar_lea.sflag [#allocation4], %s263
        %s265 = sand.u32 %s91, 1
        %s266 = smul.addr %s265, 16
        %s267 = scalar_lea.vmem [#allocation7], %s266
        // Predicated region
        $region37: #{tpu_custom_call.1} parent=27 // pred_check
          %p268 = pneg %p101
        $region38: #{tpu_custom_call.1} parent=27 // pred_check_branch
          %270 = sbr.rel (%p268) target = $region40
        $region39: #{tpu_custom_call.1} parent=27 // pred_region
          %s271 = smul.u32 2, %s25
          %273 = vsyncadd %s264, 0
          %s274 = smul.addr %s24, 2
          %s275 = sadd.s32 %s271, %s274
          %s276 = smul.addr %s275, 8
          %s277 = scalar_lea.hbm %s2, %s276
          %s279 = sshll.u32 %s267, 4
          %s280 = int_to_ptr.vmem [resolvable:$true] %s279
          %s281 = sshll.u32 %s277, 4
          %s282 = int_to_ptr.hbm [resolvable:$true] %s281
          %284 = dma.vmem_to_hbm [thread:$0]  %s280, 256, %s282, %s264
        $region40: #{tpu_custom_call.1} parent=27 // pred_fallthru
          _
      $region28: #{tpu_custom_call.1} parent=5 // pred_fallthru
        _
      %p285 = scmp.le.s32.totalorder 2, %s15
      // Predicated region
      $region41: #{tpu_custom_call.1} parent=5 // pred_check
        %p286 = pneg %p285
      $region42: #{tpu_custom_call.1} parent=5 // pred_check_branch
        %288 = sbr.rel (%p286) target = $region44
      $region43: #{tpu_custom_call.1} parent=5 // pred_region
        %s289 = ssub.s32 %s15, 2
        // Predicated region
        $region45: #{tpu_custom_call.1} parent=43 // pred_check
          %p290 = pneg %p107
        $region46: #{tpu_custom_call.1} parent=43 // pred_check_branch
          %292 = sbr.rel (%p290) target = $region48
        $region47: #{tpu_custom_call.1} parent=43 // pred_region
          %s293 = sand.u32 %s92, 1
          %s294 = scalar_lea.sflag [#allocation4], %s293
          %s295 = sand.u32 %s92, 1
          %s296 = smul.addr %s295, 16
          %s297 = scalar_lea.vmem [#allocation7], %s296
          %299 = dma.done %s294, 256
        $region48: #{tpu_custom_call.1} parent=43 // pred_fallthru
          _
      $region44: #{tpu_custom_call.1} parent=5 // pred_fallthru
        _
    $region6: #{tpu_custom_call.1} parent=1 // loop_footer
      %s19 = sadd.s32 1, %s15
    $region7: #{tpu_custom_call.1} parent=1 // loop_footer_branch
      %14 = sbr.rel target = $region3
    $region8: #{tpu_custom_call.1} parent=1 // loop_exit
      _
    %300 = vsyncpa [#allocation3], 1
    %s301 = scalar_lea.sflag [#allocation3], 1
    %302 = vsyncpa %s301, 1
    %303 = vsyncpa [#allocation6], 1
    %304 = vsyncpa [#allocation4], 1
    %s305 = scalar_lea.sflag [#allocation4], 1
    %306 = vsyncpa %s305, 1

</llo_original>
